<compile_context>
chip_gen: v6e
topology: v6e:2x2x1
jax: 0.10.0
libtpu: 0.0.40
codegen_flags: <defaults>
</compile_context>

<pallas_src>
import functools

import jax
import jax.numpy as jnp
from jax.experimental import pallas as pl
from jax.experimental.pallas import tpu as pltpu

_LANES = 128


def _tversky_partial_kernel(logits_ref, tgt_ref, out_ref, *, num_classes, keep_es):
    """Per-(batch, HW-chunk) partial sums.

    logits_ref: (1, C, rows_tile, 128)  native dtype (cast to f32 in-kernel)
    tgt_ref:    (1, rows_tile, 128)     int32 (padded positions carry -1)
    out_ref:    (1, 1, 3*C, 128) f32    rows laid out as j*C + c with
                                        j in {0: tp, 1: sum_probs, 2: count}
    """
    C = num_classes
    t = tgt_ref[0]                                            # (rows, 128) int32

    # Pass 1: running max over classes.  Re-reads VMEM (vld is cheap: 3 slots per
    # cycle) rather than keeping a second list of C live f32 slabs.
    m = logits_ref[0, 0].astype(jnp.float32)
    for c in range(1, C):
        m = jnp.maximum(m, logits_ref[0, c].astype(jnp.float32))

    # Pass 2: exp + softmax denominator (all VPU/EUP elementwise; class axis is a
    # small unrolled Python loop, no cross-sublane work).
    if keep_es:
        es = [jnp.exp(logits_ref[0, c].astype(jnp.float32) - m) for c in range(C)]
        z = es[0]
        for c in range(1, C):
            z = z + es[c]
    else:
        es = None
        z = jnp.exp(logits_ref[0, 0].astype(jnp.float32) - m)
        for c in range(1, C):
            z = z + jnp.exp(logits_ref[0, c].astype(jnp.float32) - m)

    # One reciprocal per pixel on the (otherwise idle) EUP, plus one
    # Newton-Raphson refinement (2 VPU ops) for near-exact f32.
    inv_z = pl.reciprocal(z, approx=True)
    inv_z = inv_z * (jnp.float32(2.0) - z * inv_z)

    zero = jnp.float32(0.0)
    one = jnp.float32(1.0)
    tp_rows, sp_rows, cnt_rows = [], [], []
    for c in range(C):
        e_c = es[c] if keep_es else jnp.exp(logits_ref[0, c].astype(jnp.float32) - m)
        p = e_c * inv_z                                       # probs of class c
        eq = t == c                                           # one-hot w/o iota
        tp_rows.append(jnp.sum(jnp.where(eq, p, zero), axis=0, keepdims=True))
        sp_rows.append(jnp.sum(p, axis=0, keepdims=True))
        cnt_rows.append(jnp.sum(jnp.where(eq, one, zero), axis=0, keepdims=True))

    # Single lane-dense (3C, 128) store instead of 3C masked single-row stores.
    out_ref[0, 0] = jnp.concatenate(tp_rows + sp_rows + cnt_rows, axis=0)


def _vmem_budget_bytes():
    """Generation-aware VMEM budget for this kernel's working set."""
    try:
        vmem_cap = int(pltpu.get_tpu_info().vmem_capacity_bytes)
    except Exception:
        vmem_cap = 64 * 1024 * 1024          # conservative (v7x physical)
    # Never more than ~half of physical VMEM, never more than 48 MiB.
    return min(48 * 1024 * 1024, vmem_cap // 2)


def _pick_rows_tile(rows, num_classes, logit_bytes, batch, vmem_budget):
    """Choose (rows_tile, rows_padded, needs_row_pad)."""
    # Target ~3 MiB of streamed logits per grid step.
    target = max(8, (3 * 1024 * 1024) // (_LANES * num_classes * logit_bytes))
    # Per-row VMEM: double-buffered logits+targets blocks plus f32 temporaries
    # (exp slabs when kept, m, z, inv_z, working regs).
    per_row = _LANES * (2 * (num_classes * logit_bytes + 4) + (num_classes + 5) * 4)
    target = min(target, max(8, int(0.6 * vmem_budget) // per_row))
    target = max(8, (target // 8) * 8)        # multiple of 8 sublanes

    # Keep >= ~4 total grid steps when the input allows it (feeds both v7x
    # TensorCores and hides the pipeline prologue); only shrink, never below 8.
    want_chunks = -(-4 // batch)
    if rows > 8 and -(-rows // target) < want_chunks:
        t = -(-rows // want_chunks)
        target = max(8, (t // 8) * 8)

    if rows <= target:
        return rows, rows, False              # single chunk == full dim, no pad

    # Prefer a multiple-of-8 divisor of rows: no wrapper-side jnp.pad copy.
    for t in range(target, 7, -8):
        if rows % t == 0 and t * 8 >= target:  # don't accept absurdly small tiles
            return t, rows, False

    # Fallback: pad the row axis up to a multiple of `target` (rare; the pad
    # contribution is corrected analytically in the finalization).
    rows_padded = -(-rows // target) * target
    return target, rows_padded, True


def tversky_loss(logits, targets, alpha=0.7, beta=0.3, reduction="mean"):
    """logits: (N, C, H, W) float; targets: (N, H, W) int."""
    N, C, H, W = logits.shape
    HW = H * W
    logit_bytes = jnp.dtype(logits.dtype).itemsize

    rows = -(-HW // _LANES)                             # ceil(HW / 128)
    vmem_budget = _vmem_budget_bytes()
    rows_tile, rows_padded, _ = _pick_rows_tile(rows, C, logit_bytes, N, vmem_budget)
    hw_padded = rows_padded * _LANES
    n_chunks = rows_padded // rows_tile
    pad_count = hw_padded - HW                          # 0 in the common case

    # Keep the native logits dtype (no f32 upcast in HBM); cast in-kernel.
    logits_flat = logits.reshape(N, C, HW)
    targets_flat = targets.reshape(N, HW).astype(jnp.int32)
    if pad_count > 0:
        # Pad logits with exactly 0.0 -> padded pixels softmax to uniform 1/C,
        # which is subtracted analytically below; padded targets are -1 so they
        # never match any class (tp / count unaffected).
        logits_flat = jnp.pad(logits_flat, ((0, 0), (0, 0), (0, pad_count)))
        targets_flat = jnp.pad(targets_flat, ((0, 0), (0, pad_count)),
                               constant_values=-1)

    logits_t = logits_flat.reshape(N, C, rows_padded, _LANES)
    targets_t = targets_flat.reshape(N, rows_padded, _LANES)

    keep_es = C <= 16                                   # recompute exp for huge C
    kernel = functools.partial(_tversky_partial_kernel,
                               num_classes=C, keep_es=keep_es)

    n_pixels = N * rows_padded * _LANES
    cost = pl.CostEstimate(
        flops=int(8 * C * n_pixels),
        transcendentals=int((C + 1) * n_pixels),
        bytes_accessed=int(logits_t.size * logit_bytes + targets_t.size * 4
                           + N * n_chunks * 3 * C * _LANES * 4),
    )

    partials = pl.pallas_call(
        kernel,
        out_shape=jax.ShapeDtypeStruct((N, n_chunks, 3 * C, _LANES), jnp.float32),
        grid_spec=pltpu.PrefetchScalarGridSpec(
            num_scalar_prefetch=0,
            grid=(N, n_chunks),
            in_specs=[
                pl.BlockSpec((1, C, rows_tile, _LANES), lambda n, h: (n, 0, h, 0)),
                pl.BlockSpec((1, rows_tile, _LANES), lambda n, h: (n, h, 0)),
            ],
            out_specs=pl.BlockSpec((1, 1, 3 * C, _LANES),
                                   lambda n, h: (n, h, 0, 0)),
        ),
        compiler_params=pltpu.CompilerParams(
            dimension_semantics=("parallel", "parallel"),
            vmem_limit_bytes=int(vmem_budget)),
        cost_estimate=cost,
    )(logits_t, targets_t)

    # Tiny finalization in plain JAX: reduce chunks + lanes, then Tversky algebra.
    sums = partials.sum(axis=(1, 3)).reshape(N, 3, C)   # (N, 3, C)
    tp, sp, cnt = sums[:, 0], sums[:, 1], sums[:, 2]
    if pad_count > 0:
        # Zero-logit padded pixels contribute exactly 1/C probability mass per
        # class to sum_p; tp and count are already pad-free (target == -1).
        sp = sp - (pad_count / C)
    fn = cnt - tp                                       # sum(onehot * (1 - p))
    fp = sp - tp                                        # sum((1 - onehot) * p)
    tversky = tp / (tp + alpha * fn + beta * fp + 1e-07)
    loss = 1.0 - tversky                                # (N, C)

    if reduction == "mean":
        return loss.mean()
    elif reduction == "sum":
        return loss.sum()
    else:
        return loss


def _tversky_loss_ref(logits, targets, alpha=0.7, beta=0.3):
    # pure-JAX reference mirroring the PyTorch forward
    probs = jax.nn.softmax(logits.astype(jnp.float32), axis=1)
    onehot = jax.nn.one_hot(targets, logits.shape[1], dtype=jnp.float32)
    onehot = jnp.transpose(onehot, (0, 3, 1, 2))
    tp = jnp.sum(probs * onehot, axis=(2, 3))
    fn = jnp.sum(onehot * (1 - probs), axis=(2, 3))
    fp = jnp.sum((1 - onehot) * probs, axis=(2, 3))
    tv = tp / (tp + alpha * fn + beta * fp + 1e-07)
    return (1 - tv).mean()


if __name__ == "__main__":
    key = jax.random.PRNGKey(0)
    k1, k2 = jax.random.split(key)
    N, C, H, W = 2, 4, 16, 16
    logits = jax.random.normal(k1, (N, C, H, W), dtype=jnp.float32)
    targets = jax.random.randint(k2, (N, H, W), 0, C, dtype=jnp.int32)

    out = tversky_loss(logits, targets)
    out = jax.block_until_ready(out)

    ref = _tversky_loss_ref(logits, targets)
    assert jnp.allclose(out, ref, atol=1e-5, rtol=1e-5), (out, ref)

    print("KERNEL_OK")
</pallas_src>

<mosaic_0001>
module attributes {stable_mosaic.version = 11 : i64} {
  func.func @_tversky_partial_kernel(%arg0: i32, %arg1: i32, %arg2: memref<1x4x2x128xf32, #tpu.memory_space<vmem>>, %arg3: memref<1x2x128xi32, #tpu.memory_space<vmem>>, %arg4: memref<1x1x12x128xf32, #tpu.memory_space<vmem>>) attributes {dimension_semantics = [#tpu.dimension_semantics<parallel>, #tpu.dimension_semantics<parallel>], iteration_bounds = array<i64: 2, 1>, scalar_prefetch = 0 : i64, scratch_operands = 0 : i64, tpu.core_type = #tpu.core_type<tc>, window_params = [{transform_indices = @transform_0, window_bounds = array<i64: 1, 4, 2, 128>}, {transform_indices = @transform_1, window_bounds = array<i64: 1, 2, 128>}, {transform_indices = @transform_2, window_bounds = array<i64: 1, 1, 12, 128>}]} {
    %c0 = arith.constant 0 : index
    %c0_0 = arith.constant 0 : index
    %c0_1 = arith.constant 0 : index
    %0 = vector.load %arg3[%c0, %c0_0, %c0_1] : memref<1x2x128xi32, #tpu.memory_space<vmem>>, vector<1x2x128xi32>
    %1 = vector.shape_cast %0 : vector<1x2x128xi32> to vector<2x128xi32>
    %c0_2 = arith.constant 0 : index
    %c0_3 = arith.constant 0 : index
    %c0_4 = arith.constant 0 : index
    %c0_5 = arith.constant 0 : index
    %2 = vector.load %arg2[%c0_2, %c0_3, %c0_4, %c0_5] : memref<1x4x2x128xf32, #tpu.memory_space<vmem>>, vector<1x1x2x128xf32>
    %3 = vector.shape_cast %2 : vector<1x1x2x128xf32> to vector<2x128xf32>
    %c0_6 = arith.constant 0 : index
    %c1 = arith.constant 1 : index
    %c0_7 = arith.constant 0 : index
    %c0_8 = arith.constant 0 : index
    %4 = vector.load %arg2[%c0_6, %c1, %c0_7, %c0_8] : memref<1x4x2x128xf32, #tpu.memory_space<vmem>>, vector<1x1x2x128xf32>
    %5 = vector.shape_cast %4 : vector<1x1x2x128xf32> to vector<2x128xf32>
    %6 = arith.maximumf %3, %5 : vector<2x128xf32>
    %c0_9 = arith.constant 0 : index
    %c2 = arith.constant 2 : index
    %c0_10 = arith.constant 0 : index
    %c0_11 = arith.constant 0 : index
    %7 = vector.load %arg2[%c0_9, %c2, %c0_10, %c0_11] : memref<1x4x2x128xf32, #tpu.memory_space<vmem>>, vector<1x1x2x128xf32>
    %8 = vector.shape_cast %7 : vector<1x1x2x128xf32> to vector<2x128xf32>
    %9 = arith.maximumf %6, %8 : vector<2x128xf32>
    %c0_12 = arith.constant 0 : index
    %c3 = arith.constant 3 : index
    %c0_13 = arith.constant 0 : index
    %c0_14 = arith.constant 0 : index
    %10 = vector.load %arg2[%c0_12, %c3, %c0_13, %c0_14] : memref<1x4x2x128xf32, #tpu.memory_space<vmem>>, vector<1x1x2x128xf32>
    %11 = vector.shape_cast %10 : vector<1x1x2x128xf32> to vector<2x128xf32>
    %12 = arith.maximumf %9, %11 : vector<2x128xf32>
    %c0_15 = arith.constant 0 : index
    %c0_16 = arith.constant 0 : index
    %c0_17 = arith.constant 0 : index
    %c0_18 = arith.constant 0 : index
    %13 = vector.load %arg2[%c0_15, %c0_16, %c0_17, %c0_18] : memref<1x4x2x128xf32, #tpu.memory_space<vmem>>, vector<1x1x2x128xf32>
    %14 = vector.shape_cast %13 : vector<1x1x2x128xf32> to vector<2x128xf32>
    %15 = arith.subf %14, %12 : vector<2x128xf32>
    %16 = math.exp %15 : vector<2x128xf32>
    %c0_19 = arith.constant 0 : index
    %c1_20 = arith.constant 1 : index
    %c0_21 = arith.constant 0 : index
    %c0_22 = arith.constant 0 : index
    %17 = vector.load %arg2[%c0_19, %c1_20, %c0_21, %c0_22] : memref<1x4x2x128xf32, #tpu.memory_space<vmem>>, vector<1x1x2x128xf32>
    %18 = vector.shape_cast %17 : vector<1x1x2x128xf32> to vector<2x128xf32>
    %19 = arith.subf %18, %12 : vector<2x128xf32>
    %20 = math.exp %19 : vector<2x128xf32>
    %c0_23 = arith.constant 0 : index
    %c2_24 = arith.constant 2 : index
    %c0_25 = arith.constant 0 : index
    %c0_26 = arith.constant 0 : index
    %21 = vector.load %arg2[%c0_23, %c2_24, %c0_25, %c0_26] : memref<1x4x2x128xf32, #tpu.memory_space<vmem>>, vector<1x1x2x128xf32>
    %22 = vector.shape_cast %21 : vector<1x1x2x128xf32> to vector<2x128xf32>
    %23 = arith.subf %22, %12 : vector<2x128xf32>
    %24 = math.exp %23 : vector<2x128xf32>
    %c0_27 = arith.constant 0 : index
    %c3_28 = arith.constant 3 : index
    %c0_29 = arith.constant 0 : index
    %c0_30 = arith.constant 0 : index
    %25 = vector.load %arg2[%c0_27, %c3_28, %c0_29, %c0_30] : memref<1x4x2x128xf32, #tpu.memory_space<vmem>>, vector<1x1x2x128xf32>
    %26 = vector.shape_cast %25 : vector<1x1x2x128xf32> to vector<2x128xf32>
    %27 = arith.subf %26, %12 : vector<2x128xf32>
    %28 = math.exp %27 : vector<2x128xf32>
    %29 = arith.addf %16, %20 : vector<2x128xf32>
    %30 = arith.addf %29, %24 : vector<2x128xf32>
    %31 = arith.addf %30, %28 : vector<2x128xf32>
    %32 = tpu.reciprocal %31 {approx = true} : vector<2x128xf32> -> vector<2x128xf32>
    %33 = arith.mulf %31, %32 : vector<2x128xf32>
    %cst = arith.constant 2.000000e+00 : f32
    %34 = vector.broadcast %cst : f32 to vector<2x128xf32>
    %35 = arith.subf %34, %33 : vector<2x128xf32>
    %36 = arith.mulf %32, %35 : vector<2x128xf32>
    %37 = arith.mulf %16, %36 : vector<2x128xf32>
    %c0_i32 = arith.constant 0 : i32
    %38 = vector.broadcast %c0_i32 : i32 to vector<2x128xi32>
    %39 = arith.cmpi eq, %1, %38 : vector<2x128xi32>
    %cst_31 = arith.constant 0.000000e+00 : f32
    %40 = vector.broadcast %cst_31 : f32 to vector<2x128xf32>
    %41 = arith.select %39, %37, %40 : vector<2x128xi1>, vector<2x128xf32>
    %cst_32 = arith.constant dense<0.000000e+00> : vector<128xf32>
    %42 = vector.multi_reduction <add>, %41, %cst_32 [0] : vector<2x128xf32> to vector<128xf32>
    %43 = vector.shape_cast %42 : vector<128xf32> to vector<1x128xf32>
    %cst_33 = arith.constant dense<0.000000e+00> : vector<128xf32>
    %44 = vector.multi_reduction <add>, %37, %cst_33 [0] : vector<2x128xf32> to vector<128xf32>
    %45 = vector.shape_cast %44 : vector<128xf32> to vector<1x128xf32>
    %cst_34 = arith.constant 1.000000e+00 : f32
    %cst_35 = arith.constant 0.000000e+00 : f32
    %46 = vector.broadcast %cst_34 : f32 to vector<2x128xf32>
    %47 = vector.broadcast %cst_35 : f32 to vector<2x128xf32>
    %48 = arith.select %39, %46, %47 : vector<2x128xi1>, vector<2x128xf32>
    %cst_36 = arith.constant dense<0.000000e+00> : vector<128xf32>
    %49 = vector.multi_reduction <add>, %48, %cst_36 [0] : vector<2x128xf32> to vector<128xf32>
    %50 = vector.shape_cast %49 : vector<128xf32> to vector<1x128xf32>
    %51 = arith.mulf %20, %36 : vector<2x128xf32>
    %c1_i32 = arith.constant 1 : i32
    %52 = vector.broadcast %c1_i32 : i32 to vector<2x128xi32>
    %53 = arith.cmpi eq, %1, %52 : vector<2x128xi32>
    %cst_37 = arith.constant 0.000000e+00 : f32
    %54 = vector.broadcast %cst_37 : f32 to vector<2x128xf32>
    %55 = arith.select %53, %51, %54 : vector<2x128xi1>, vector<2x128xf32>
    %cst_38 = arith.constant dense<0.000000e+00> : vector<128xf32>
    %56 = vector.multi_reduction <add>, %55, %cst_38 [0] : vector<2x128xf32> to vector<128xf32>
    %57 = vector.shape_cast %56 : vector<128xf32> to vector<1x128xf32>
    %cst_39 = arith.constant dense<0.000000e+00> : vector<128xf32>
    %58 = vector.multi_reduction <add>, %51, %cst_39 [0] : vector<2x128xf32> to vector<128xf32>
    %59 = vector.shape_cast %58 : vector<128xf32> to vector<1x128xf32>
    %cst_40 = arith.constant 1.000000e+00 : f32
    %cst_41 = arith.constant 0.000000e+00 : f32
    %60 = vector.broadcast %cst_40 : f32 to vector<2x128xf32>
    %61 = vector.broadcast %cst_41 : f32 to vector<2x128xf32>
    %62 = arith.select %53, %60, %61 : vector<2x128xi1>, vector<2x128xf32>
    %cst_42 = arith.constant dense<0.000000e+00> : vector<128xf32>
    %63 = vector.multi_reduction <add>, %62, %cst_42 [0] : vector<2x128xf32> to vector<128xf32>
    %64 = vector.shape_cast %63 : vector<128xf32> to vector<1x128xf32>
    %65 = arith.mulf %24, %36 : vector<2x128xf32>
    %c2_i32 = arith.constant 2 : i32
    %66 = vector.broadcast %c2_i32 : i32 to vector<2x128xi32>
    %67 = arith.cmpi eq, %1, %66 : vector<2x128xi32>
    %cst_43 = arith.constant 0.000000e+00 : f32
    %68 = vector.broadcast %cst_43 : f32 to vector<2x128xf32>
    %69 = arith.select %67, %65, %68 : vector<2x128xi1>, vector<2x128xf32>
    %cst_44 = arith.constant dense<0.000000e+00> : vector<128xf32>
    %70 = vector.multi_reduction <add>, %69, %cst_44 [0] : vector<2x128xf32> to vector<128xf32>
    %71 = vector.shape_cast %70 : vector<128xf32> to vector<1x128xf32>
    %cst_45 = arith.constant dense<0.000000e+00> : vector<128xf32>
    %72 = vector.multi_reduction <add>, %65, %cst_45 [0] : vector<2x128xf32> to vector<128xf32>
    %73 = vector.shape_cast %72 : vector<128xf32> to vector<1x128xf32>
    %cst_46 = arith.constant 1.000000e+00 : f32
    %cst_47 = arith.constant 0.000000e+00 : f32
    %74 = vector.broadcast %cst_46 : f32 to vector<2x128xf32>
    %75 = vector.broadcast %cst_47 : f32 to vector<2x128xf32>
    %76 = arith.select %67, %74, %75 : vector<2x128xi1>, vector<2x128xf32>
    %cst_48 = arith.constant dense<0.000000e+00> : vector<128xf32>
    %77 = vector.multi_reduction <add>, %76, %cst_48 [0] : vector<2x128xf32> to vector<128xf32>
    %78 = vector.shape_cast %77 : vector<128xf32> to vector<1x128xf32>
    %79 = arith.mulf %28, %36 : vector<2x128xf32>
    %c3_i32 = arith.constant 3 : i32
    %80 = vector.broadcast %c3_i32 : i32 to vector<2x128xi32>
    %81 = arith.cmpi eq, %1, %80 : vector<2x128xi32>
    %cst_49 = arith.constant 0.000000e+00 : f32
    %82 = vector.broadcast %cst_49 : f32 to vector<2x128xf32>
    %83 = arith.select %81, %79, %82 : vector<2x128xi1>, vector<2x128xf32>
    %cst_50 = arith.constant dense<0.000000e+00> : vector<128xf32>
    %84 = vector.multi_reduction <add>, %83, %cst_50 [0] : vector<2x128xf32> to vector<128xf32>
    %85 = vector.shape_cast %84 : vector<128xf32> to vector<1x128xf32>
    %cst_51 = arith.constant dense<0.000000e+00> : vector<128xf32>
    %86 = vector.multi_reduction <add>, %79, %cst_51 [0] : vector<2x128xf32> to vector<128xf32>
    %87 = vector.shape_cast %86 : vector<128xf32> to vector<1x128xf32>
    %cst_52 = arith.constant 1.000000e+00 : f32
    %cst_53 = arith.constant 0.000000e+00 : f32
    %88 = vector.broadcast %cst_52 : f32 to vector<2x128xf32>
    %89 = vector.broadcast %cst_53 : f32 to vector<2x128xf32>
    %90 = arith.select %81, %88, %89 : vector<2x128xi1>, vector<2x128xf32>
    %cst_54 = arith.constant dense<0.000000e+00> : vector<128xf32>
    %91 = vector.multi_reduction <add>, %90, %cst_54 [0] : vector<2x128xf32> to vector<128xf32>
    %92 = vector.shape_cast %91 : vector<128xf32> to vector<1x128xf32>
    %93 = tpu.concatenate %43, %57, %71, %85, %45, %59, %73, %87, %50, %64, %78, %92 in 0 : vector<1x128xf32>, vector<1x128xf32>, vector<1x128xf32>, vector<1x128xf32>, vector<1x128xf32>, vector<1x128xf32>, vector<1x128xf32>, vector<1x128xf32>, vector<1x128xf32>, vector<1x128xf32>, vector<1x128xf32>, vector<1x128xf32> -> vector<12x128xf32>
    %c0_55 = arith.constant 0 : index
    %c0_56 = arith.constant 0 : index
    %c0_57 = arith.constant 0 : index
    %c0_58 = arith.constant 0 : index
    %94 = vector.load %arg4[%c0_55, %c0_56, %c0_57, %c0_58] : memref<1x1x12x128xf32, #tpu.memory_space<vmem>>, vector<1x1x12x128xf32>
    %95 = vector.shape_cast %94 : vector<1x1x12x128xf32> to vector<12x128xf32>
    %96 = vector.shape_cast %93 : vector<12x128xf32> to vector<1x1x12x128xf32>
    tpu.vector_store %arg4[%c0_55, %c0_56, %c0_57, %c0_58], %96 {strides = array<i32>} : memref<1x1x12x128xf32, #tpu.memory_space<vmem>>, vector<1x1x12x128xf32>,
    return
  }
  func.func @transform_0(%arg0: i32, %arg1: i32) -> (i32, i32, i32, i32) {
    %c0_i32 = arith.constant 0 : i32
    %c0_i32_0 = arith.constant 0 : i32
    %c0_i32_1 = arith.constant 0 : i32
    return %arg0, %c0_i32, %arg1, %c0_i32_0 : i32, i32, i32, i32
  }
  func.func @transform_1(%arg0: i32, %arg1: i32) -> (i32, i32, i32) {
    %c0_i32 = arith.constant 0 : i32
    %c0_i32_0 = arith.constant 0 : i32
    return %arg0, %arg1, %c0_i32 : i32, i32, i32
  }
  func.func @transform_2(%arg0: i32, %arg1: i32) -> (i32, i32, i32, i32) {
    %c0_i32 = arith.constant 0 : i32
    %c0_i32_0 = arith.constant 0 : i32
    %c0_i32_1 = arith.constant 0 : i32
    return %arg0, %arg1, %c0_i32, %c0_i32_0 : i32, i32, i32, i32
  }
}

</mosaic_0001>

<llo_original>
// kernel: tpu_custom_call.1
$region0: #{tpu_custom_call.1}
  #allocation0 [shape = 'u32[]', space=smem, size = 0x4, offset = 0x4, fixed_abs, tag = 'smem constant byte address 0x4 - core index']
  #allocation1 [shape = 'u32[144,128]{1,0:T(1,128)}', space=vmem, size = 0x12000, scoped, tag = 'internal scratch']
  %s0 = inlined_call_operand.hbm [shape: f32[2,4,2,128], index: 0, kind: input, shape index: {}]
  %s1 = inlined_call_operand.hbm [shape: s32[2,2,128], index: 1, kind: input, shape index: {}]
  %s2 = inlined_call_operand.vmem [shape: f32[2,1,12,128], index: 2, kind: output, shape index: {}]
  %s3 = sld [smem:[#allocation0]]
  $region49: #{tpu_custom_call.1} parent=0
    _
  %s5 = ssub.s32 1, %s3
  %s6 = scalar_select 0, %s5, %s3
  $region1: #{tpu_custom_call.1} parent=0
    #allocation2 [shape = 'u8[8192]{0}', space=vmem, size = 0x2000, scoped, tag = 'input window, operand 0']
    #allocation3 [shape = 's32[2]{0}', space=sflag, size = 0x8, scoped, tag = 'scoped memory for tpu_custom_call.1']
    #allocation4 [shape = 'u8[2048]{0}', space=vmem, size = 0x800, scoped, tag = 'input window, operand 1']
    #allocation5 [shape = 's32[2]{0}', space=sflag, size = 0x8, scoped, tag = 'scoped memory for tpu_custom_call.1']
    %7 = vsyncpa [#allocation3], 0
    %s8 = scalar_lea.sflag [#allocation3], 1
    %9 = vsyncpa %s8, 0
    %10 = vsyncpa [#allocation5], 0
    %s11 = scalar_lea.sflag [#allocation5], 1
    %12 = vsyncpa %s11, 0
    loop: start=0, step=1, limit=4
    $region2: #{tpu_custom_call.1} parent=1 // loop_pre_header
      _
    $region3: #{tpu_custom_call.1} parent=1 // loop_header
      %s14 = sphi 0, %s18
      %p15 = scmp.ge.s32.totalorder %s14, 4
      %s21 = sphi 0, %s33
      %s22 = sphi 0, %s29
      %s23 = sphi 0, %s21
      %s24 = sphi 0, %s22
      %s25 = sphi 0, %s23
      %s26 = sphi 0, %s24
      %s38 = sphi 0, %s40
      %s41 = sphi 0, %s38
      %s42 = sphi 0, %s41
      %s58 = sphi 0, %s42
      %s66 = sphi 0, %s68
      %s69 = sphi 0, %s66
      %s70 = sphi 0, %s69
      %s86 = sphi 0, %s70
      %s94 = sphi 0, %s96
      %s97 = sphi 0, %s94
      %s98 = sphi 0, %s97
      %s114 = sphi 0, %s98
    $region4: #{tpu_custom_call.1} parent=1 // loop_header_branch
      %17 = sbr.rel (%p15) target = $region8
    $region5: #{tpu_custom_call.1} parent=1 // loop_body
      %s19 = ssub.s32 %s14, 1
      %s20 = ssub.s32 %s14, 2
      %s27 = sadd.s32 1, %s22
      %p28 = scmp.ge.s32.totalorder %s27, 1
      %s29 = scalar_select %p28, 0, %s27
      %s30 = sadd.s32 1, %s21
      %s31 = scalar_select %p28, %s30, %s21
      %p32 = scmp.ge.s32.totalorder %s31, 2
      %s33 = scalar_select %p32, 0, %s31
      %s34 = ssub.s32 %s21, %s33
      %s35 = ssub.s32 %s22, %s29
      %s36 = sor.u32 %s34, %s35
      %p37 = scmp.eq.s32.totalorder %s36, 0
      %s39 = sadd.s32 %s38, 1
      %s40 = scalar_select %p37, %s38, %s39
      %p43 = pneg %p37
      %p44 = scmp.eq.s32.totalorder %s14, 1
      %p45 = por %p43, %p44
      %p46 = scmp.ne.s32.totalorder %s38, %s41
      %p47 = scmp.eq.s32.totalorder %s14, 0
      %p48 = por %p46, %p47
      %p49 = scmp.ne.s32.totalorder %s38, %s41
      %p50 = scmp.eq.s32.totalorder %s19, 1
      %p51 = por %p49, %p50
      %p52 = scmp.ne.s32.totalorder %s41, %s42
      %p53 = scmp.eq.s32.totalorder %s19, 0
      %p54 = por %p52, %p53
      %p55 = scmp.ne.s32.totalorder %s41, %s42
      %p56 = scmp.eq.s32.totalorder %s20, 1
      %p57 = por %p55, %p56
      %p59 = scmp.ne.s32.totalorder %s42, %s58
      %p60 = scmp.eq.s32.totalorder %s20, 0
      %p61 = por %p59, %p60
      %s62 = ssub.s32 %s21, %s33
      %s63 = ssub.s32 %s22, %s29
      %s64 = sor.u32 %s62, %s63
      %p65 = scmp.eq.s32.totalorder %s64, 0
      %s67 = sadd.s32 %s66, 1
      %s68 = scalar_select %p65, %s66, %s67
      %p71 = pneg %p65
      %p72 = scmp.eq.s32.totalorder %s14, 1
      %p73 = por %p71, %p72
      %p74 = scmp.ne.s32.totalorder %s66, %s69
      %p75 = scmp.eq.s32.totalorder %s14, 0
      %p76 = por %p74, %p75
      %p77 = scmp.ne.s32.totalorder %s66, %s69
      %p78 = scmp.eq.s32.totalorder %s19, 1
      %p79 = por %p77, %p78
      %p80 = scmp.ne.s32.totalorder %s69, %s70
      %p81 = scmp.eq.s32.totalorder %s19, 0
      %p82 = por %p80, %p81
      %p83 = scmp.ne.s32.totalorder %s69, %s70
      %p84 = scmp.eq.s32.totalorder %s20, 1
      %p85 = por %p83, %p84
      %p87 = scmp.ne.s32.totalorder %s70, %s86
      %p88 = scmp.eq.s32.totalorder %s20, 0
      %p89 = por %p87, %p88
      %s90 = ssub.s32 %s21, %s33
      %s91 = ssub.s32 %s22, %s29
      %s92 = sor.u32 %s90, %s91
      %p93 = scmp.eq.s32.totalorder %s92, 0
      %s95 = sadd.s32 %s94, 1
      %s96 = scalar_select %p93, %s94, %s95
      %p99 = pneg %p93
      %p100 = scmp.eq.s32.totalorder %s14, 1
      %p101 = por %p99, %p100
      %p102 = scmp.ne.s32.totalorder %s94, %s97
      %p103 = scmp.eq.s32.totalorder %s14, 0
      %p104 = por %p102, %p103
      %p105 = scmp.ne.s32.totalorder %s94, %s97
      %p106 = scmp.eq.s32.totalorder %s19, 1
      %p107 = por %p105, %p106
      %p108 = scmp.ne.s32.totalorder %s97, %s98
      %p109 = scmp.eq.s32.totalorder %s19, 0
      %p110 = por %p108, %p109
      %p111 = scmp.ne.s32.totalorder %s97, %s98
      %p112 = scmp.eq.s32.totalorder %s20, 1
      %p113 = por %p111, %p112
      %p115 = scmp.ne.s32.totalorder %s98, %s114
      %p116 = scmp.eq.s32.totalorder %s20, 0
      %p117 = por %p115, %p116
      %p118 = scmp.le.s32.totalorder 1, %s14
      %p119 = scmp.lt.s32.totalorder %s14, 3
      %p120 = pnand %p118, %p119
      %p121 = pneg %p120
      // Predicated region
      $region9: #{tpu_custom_call.1} parent=5 // pred_check
        _
      $region10: #{tpu_custom_call.1} parent=5 // pred_check_branch
        %123 = sbr.rel (%p120) target = $region12
      $region11: #{tpu_custom_call.1} parent=5 // pred_region
        %s124 = ssub.s32 %s14, 1
      $region12: #{tpu_custom_call.1} parent=5 // pred_fallthru
        _
      %p125 = scmp.lt.s32.totalorder %s14, 2
      // Predicated region
      $region13: #{tpu_custom_call.1} parent=5 // pred_check
        %p126 = pneg %p125
      $region14: #{tpu_custom_call.1} parent=5 // pred_check_branch
        %128 = sbr.rel (%p126) target = $region16
      $region15: #{tpu_custom_call.1} parent=5 // pred_region
        // Predicated region
        $region17: #{tpu_custom_call.1} parent=15 // pred_check
          %p129 = pneg %p48
        $region18: #{tpu_custom_call.1} parent=15 // pred_check_branch
          %131 = sbr.rel (%p129) target = $region20
        $region19: #{tpu_custom_call.1} parent=15 // pred_region
          %s132 = sand.u32 %s38, 1
          %s133 = scalar_lea.sflag [#allocation3], %s132
          %s134 = sand.u32 %s38, 1
          %s135 = smul.addr %s134, 8
          %s136 = scalar_lea.vmem [#allocation2], %s135
          %s138 = ssub.s32 128, 128
          %139 = vsyncadd %s133, %s138
          %s140 = smul.addr %s21, 4
          %s141 = sadd.s32 %s22, %s140
          %s142 = smul.addr %s141, 32
          %s143 = scalar_lea.hbm %s0, %s142
          %s144 = sshll.u32 %s136, 4
          %s145 = int_to_ptr.vmem [resolvable:$true] %s144
          %150 = dma.hbm_to_vmem [thread:$0]  %s143, 128, %s145, %s133, 32, 32, 2
        $region20: #{tpu_custom_call.1} parent=15 // pred_fallthru
          _
        // Predicated region
        $region21: #{tpu_custom_call.1} parent=15 // pred_check
          %p151 = pneg %p76
        $region22: #{tpu_custom_call.1} parent=15 // pred_check_branch
          %153 = sbr.rel (%p151) target = $region24
        $region23: #{tpu_custom_call.1} parent=15 // pred_region
          %s154 = sand.u32 %s66, 1
          %s155 = scalar_lea.sflag [#allocation5], %s154
          %s156 = sand.u32 %s66, 1
          %s157 = smul.addr %s156, 2
          %s158 = scalar_lea.vmem [#allocation4], %s157
          %s160 = ssub.s32 32, 32
          %161 = vsyncadd %s155, %s160
          %s162 = sadd.s32 %s22, %s21
          %s163 = smul.addr %s162, 32
          %s164 = scalar_lea.hbm %s1, %s163
          %s166 = sshll.u32 %s158, 4
          %s167 = int_to_ptr.vmem [resolvable:$true] %s166
          %169 = dma.hbm_to_vmem [thread:$0]  %s164, 32, %s167, %s155
        $region24: #{tpu_custom_call.1} parent=15 // pred_fallthru
          _
      $region16: #{tpu_custom_call.1} parent=5 // pred_fallthru
        _
      %p170 = scmp.le.s32.totalorder 1, %s14
      %p171 = scmp.lt.s32.totalorder %s14, 3
      %p172 = pnand %p170, %p171
      %p173 = pneg %p172
      // Predicated region
      $region25: #{tpu_custom_call.1} parent=5 // pred_check
        _
      $region26: #{tpu_custom_call.1} parent=5 // pred_check_branch
        %175 = sbr.rel (%p172) target = $region28
      $region27: #{tpu_custom_call.1} parent=5 // pred_region
        %s176 = ssub.s32 %s14, 1
        %s177 = sand.u32 %s41, 1
        %s178 = scalar_lea.sflag [#allocation3], %s177
        %s179 = sand.u32 %s41, 1
        %s180 = smul.addr %s179, 8
        %s181 = scalar_lea.vmem [#allocation2], %s180
        // Predicated region
        $region29: #{tpu_custom_call.1} parent=27 // pred_check
          %p182 = pneg %p54
        $region30: #{tpu_custom_call.1} parent=27 // pred_check_branch
          %184 = sbr.rel (%p182) target = $region32
        $region31: #{tpu_custom_call.1} parent=27 // pred_region
          %185 = dma.done %s178, 128
        $region32: #{tpu_custom_call.1} parent=27 // pred_fallthru
          _
        %s186 = sand.u32 %s69, 1
        %s187 = scalar_lea.sflag [#allocation5], %s186
        %s188 = sand.u32 %s69, 1
        %s189 = smul.addr %s188, 2
        %s190 = scalar_lea.vmem [#allocation4], %s189
        // Predicated region
        $region33: #{tpu_custom_call.1} parent=27 // pred_check
          %p191 = pneg %p82
        $region34: #{tpu_custom_call.1} parent=27 // pred_check_branch
          %193 = sbr.rel (%p191) target = $region36
        $region35: #{tpu_custom_call.1} parent=27 // pred_region
          %194 = dma.done %s187, 32
        $region36: #{tpu_custom_call.1} parent=27 // pred_fallthru
          _
        %s195 = sand.u32 %s41, 1
        %s196 = scalar_lea.sflag [#allocation3], %s195
        %s197 = sand.u32 %s41, 1
        %s198 = smul.addr %s197, 8
        %s199 = scalar_lea.vmem [#allocation2], %s198
        %p200 = pneg %p54
        %p201 = pneg %p51
        %s202 = sand.u32 %s69, 1
        %s203 = scalar_lea.sflag [#allocation5], %s202
        %s204 = sand.u32 %s69, 1
        %s205 = smul.addr %s204, 2
        %s206 = scalar_lea.vmem [#allocation4], %s205
        %p207 = pneg %p82
        %p208 = pneg %p79
        %p209 = pneg %p110
        %p210 = pneg %p107
        %p211 = scmp.lt.s32.totalorder %s23, 1
        %s212 = scalar_select %p211, %s23, 1
        %p213 = scmp.lt.s32.totalorder %s24, 0
        %s214 = scalar_select %p213, %s24, 0
        %s215 = smul.addr %s214, 2
        %s216 = smul.addr %s212, 2
        %s217 = sadd.s32 %s215, %s216
        %s218 = smul.addr %s217, 8
        %s219 = scalar_lea.vmem %s2, %s218
        %p220 = scmp.lt.s32.totalorder %s23, 1
        %s221 = scalar_select %p220, %s23, 1
        %p222 = scmp.lt.s32.totalorder %s24, 0
        %s223 = scalar_select %p222, %s24, 0
        %s224 = smul.addr %s223, 2
        %s225 = smul.addr %s221, 2
        %s226 = sadd.s32 %s224, %s225
        %s227 = smul.addr %s226, 8
        %s228 = scalar_lea.vmem %s2, %s227
        %v229 = vld [vmem:[%s190] sm:$0x3]
        %v230 = vld [vmem:[%s181] sm:$0x3]
        %s231 = scalar_lea.vmem %s181, 2 [#allocation2]
        %v232 = vld [vmem:[%s231] sm:$0x3]
        %v233 = vmax.f32 %v230, %v232
        %s234 = scalar_lea.vmem %s181, 4 [#allocation2]
        %v235 = vld [vmem:[%s234] sm:$0x3]
        %v236 = vmax.f32 %v233, %v235
        %s237 = scalar_lea.vmem %s181, 6 [#allocation2]
        %v238 = vld [vmem:[%s237] sm:$0x3]
        %v239 = vmax.f32 %v236, %v238
        %v240 = vsub.f32 %v230, %v239
        %v241 = vmul.f32 %v240, 1.442695
        %v242 = vpow.pop %v241
        %v243 = vsub.f32 %v232, %v239
        %v244 = vmul.f32 %v243, 1.442695
        %v245 = vpow.pop %v244
        %v246 = vsub.f32 %v235, %v239
        %v247 = vmul.f32 %v246, 1.442695
        %v248 = vpow.pop %v247
        %v249 = vsub.f32 %v238, %v239
        %v250 = vmul.f32 %v249, 1.442695
        %v251 = vpow.pop %v250
        %v252 = vadd.f32 %v242, %v245
        %v253 = vadd.f32 %v252, %v248
        %v254 = vadd.f32 %v253, %v251
        %v255 = vrcp.pop %v254
        %v256 = vmul.f32 %v254, %v255
        %v257 = vsub.f32 2.0, %v256
        %v258 = vmul.f32 %v255, %v257
        %v259 = vmul.f32 %v242, %v258
        %vm260 = vcmp.eq.s32.totalorder %v229, 0
        %v261 = vsel %vm260, %v259, 0.0
        %vm262 = vcmask 1041408
        %v263 = vsel %vm262, %v261, 0.0
        %v264 = vrot.slane %v263, 4
        %v265 = vadd.f32 %v263, %v264
        %v266 = vrot.slane %v265, 2
        %v267 = vadd.f32 %v265, %v266
        %v268 = vrot.slane %v267, 1
        %v269 = vadd.f32 %v267, %v268
        %v270 = vsel %vm262, %v259, 0.0
        %v271 = vrot.slane %v270, 4
        %v272 = vadd.f32 %v270, %v271
        %v273 = vrot.slane %v272, 2
        %v274 = vadd.f32 %v272, %v273
        %v275 = vrot.slane %v274, 1
        %v276 = vadd.f32 %v274, %v275
        %v277 = vsel %vm260, 1.0, 0.0
        %v278 = vsel %vm262, %v277, 0.0
        %v279 = vrot.slane %v278, 4
        %v280 = vadd.f32 %v278, %v279
        %v281 = vrot.slane %v280, 2
        %v282 = vadd.f32 %v280, %v281
        %v283 = vrot.slane %v282, 1
        %v284 = vadd.f32 %v282, %v283
        %v285 = vmul.f32 %v245, %v258
        %vm286 = vcmp.eq.s32.totalorder %v229, 1
        %v287 = vsel %vm286, %v285, 0.0
        %v288 = vsel %vm262, %v287, 0.0
        %v289 = vrot.slane %v288, 4
        %v290 = vadd.f32 %v288, %v289
        %v291 = vrot.slane %v290, 2
        %v292 = vadd.f32 %v290, %v291
        %v293 = vrot.slane %v292, 1
        %v294 = vadd.f32 %v292, %v293
        %v295 = vsel %vm262, %v285, 0.0
        %v296 = vrot.slane %v295, 4
        %v297 = vadd.f32 %v295, %v296
        %v298 = vrot.slane %v297, 2
        %v299 = vadd.f32 %v297, %v298
        %v300 = vrot.slane %v299, 1
        %v301 = vadd.f32 %v299, %v300
        %v302 = vsel %vm286, 1.0, 0.0
        %v303 = vsel %vm262, %v302, 0.0
        %v304 = vrot.slane %v303, 4
        %v305 = vadd.f32 %v303, %v304
        %v306 = vrot.slane %v305, 2
        %v307 = vadd.f32 %v305, %v306
        %v308 = vrot.slane %v307, 1
        %v309 = vadd.f32 %v307, %v308
        %v310 = vmul.f32 %v248, %v258
        %vm311 = vcmp.eq.s32.totalorder %v229, 2
        %v312 = vsel %vm311, %v310, 0.0
        %v313 = vsel %vm262, %v312, 0.0
        %v314 = vrot.slane %v313, 4
        %v315 = vadd.f32 %v313, %v314
        %v316 = vrot.slane %v315, 2
        %v317 = vadd.f32 %v315, %v316
        %v318 = vrot.slane %v317, 1
        %v319 = vadd.f32 %v317, %v318
        %v320 = vsel %vm262, %v310, 0.0
        %v321 = vrot.slane %v320, 4
        %v322 = vadd.f32 %v320, %v321
        %v323 = vrot.slane %v322, 2
        %v324 = vadd.f32 %v322, %v323
        %v325 = vrot.slane %v324, 1
        %v326 = vadd.f32 %v324, %v325
        %v327 = vsel %vm311, 1.0, 0.0
        %v328 = vsel %vm262, %v327, 0.0
        %v329 = vrot.slane %v328, 4
        %v330 = vadd.f32 %v328, %v329
        %v331 = vrot.slane %v330, 2
        %v332 = vadd.f32 %v330, %v331
        %v333 = vrot.slane %v332, 1
        %v334 = vadd.f32 %v332, %v333
        %v335 = vmul.f32 %v251, %v258
        %vm336 = vcmp.eq.s32.totalorder %v229, 3
        %v337 = vsel %vm336, %v335, 0.0
        %v338 = vsel %vm262, %v337, 0.0
        %v339 = vrot.slane %v338, 4
        %v340 = vadd.f32 %v338, %v339
        %v341 = vrot.slane %v340, 2
        %v342 = vadd.f32 %v340, %v341
        %v343 = vrot.slane %v342, 1
        %v344 = vadd.f32 %v342, %v343
        %v345 = vsel %vm262, %v335, 0.0
        %v346 = vrot.slane %v345, 4
        %v347 = vadd.f32 %v345, %v346
        %v348 = vrot.slane %v347, 2
        %v349 = vadd.f32 %v347, %v348
        %v350 = vrot.slane %v349, 1
        %v351 = vadd.f32 %v349, %v350
        %v352 = vsel %vm336, 1.0, 0.0
        %v353 = vsel %vm262, %v352, 0.0
        %v354 = vrot.slane %v353, 4
        %v355 = vadd.f32 %v353, %v354
        %v356 = vrot.slane %v355, 2
        %v357 = vadd.f32 %v355, %v356
        %v358 = vrot.slane %v357, 1
        %v359 = vadd.f32 %v357, %v358
        %vm360 = vcmask 1040384
        %v361 = vsel %vm360, %v269, %v294
        %v362 = vsel %vm262, %v361, %v319
        %vm363 = vcmask 1042432
        %v364 = vsel %vm363, %v362, %v344
        %vm365 = vcmask 1043456
        %v366 = vsel %vm365, %v364, %v276
        %vm367 = vcmask 1044480
        %v368 = vsel %vm367, %v366, %v301
        %vm369 = vcmask 1045504
        %v370 = vsel %vm369, %v368, %v326
        %vm371 = vcmask 1046528
        %v372 = vsel %vm371, %v370, %v351
        %v373 = vsel %vm360, %v284, %v309
        %v374 = vsel %vm262, %v373, %v334
        %v375 = vsel %vm363, %v374, %v359
        %376 = vst [vmem:[%s228] sm:$0xff] %v372
        %377 = vst [vmem:[%s228 + $0x8] sm:$0xf] %v375
        %p378 = scmp.lt.s32.totalorder %s23, 1
        %s379 = scalar_select %p378, %s23, 1
        %p380 = scmp.lt.s32.totalorder %s24, 0
        %s381 = scalar_select %p380, %s24, 0
        %s382 = smul.addr %s381, 2
        %s383 = smul.addr %s379, 2
        %s384 = sadd.s32 %s382, %s383
        %s385 = smul.addr %s384, 8
        %s386 = scalar_lea.vmem %s2, %s385
        // Predicated region
        $region37: #{tpu_custom_call.1} parent=27 // pred_check
          %p387 = pneg %p107
        $region38: #{tpu_custom_call.1} parent=27 // pred_check_branch
          %389 = sbr.rel (%p387) target = $region40
        $region39: #{tpu_custom_call.1} parent=27 // pred_region
          _
        $region40: #{tpu_custom_call.1} parent=27 // pred_fallthru
          _
      $region28: #{tpu_custom_call.1} parent=5 // pred_fallthru
        _
      %p390 = scmp.le.s32.totalorder 2, %s14
      // Predicated region
      $region41: #{tpu_custom_call.1} parent=5 // pred_check
        %p391 = pneg %p390
      $region42: #{tpu_custom_call.1} parent=5 // pred_check_branch
        %393 = sbr.rel (%p391) target = $region44
      $region43: #{tpu_custom_call.1} parent=5 // pred_region
        %s394 = ssub.s32 %s14, 2
        // Predicated region
        $region45: #{tpu_custom_call.1} parent=43 // pred_check
          %p395 = pneg %p113
        $region46: #{tpu_custom_call.1} parent=43 // pred_check_branch
          %397 = sbr.rel (%p395) target = $region48
        $region47: #{tpu_custom_call.1} parent=43 // pred_region
          %p398 = scmp.lt.s32.totalorder %s25, 1
          %s399 = scalar_select %p398, %s25, 1
          %p400 = scmp.lt.s32.totalorder %s26, 0
          %s401 = scalar_select %p400, %s26, 0
          %s402 = smul.addr %s401, 2
          %s403 = smul.addr %s399, 2
          %s404 = sadd.s32 %s402, %s403
          %s405 = smul.addr %s404, 8
          %s406 = scalar_lea.vmem %s2, %s405
        $region48: #{tpu_custom_call.1} parent=43 // pred_fallthru
          _
      $region44: #{tpu_custom_call.1} parent=5 // pred_fallthru
        _
    $region6: #{tpu_custom_call.1} parent=1 // loop_footer
      %s18 = sadd.s32 1, %s14
    $region7: #{tpu_custom_call.1} parent=1 // loop_footer_branch
      %13 = sbr.rel target = $region3
    $region8: #{tpu_custom_call.1} parent=1 // loop_exit
      _
    %407 = vsyncpa [#allocation3], 1
    %s408 = scalar_lea.sflag [#allocation3], 1
    %409 = vsyncpa %s408, 1
    %410 = vsyncpa [#allocation5], 1
    %s411 = scalar_lea.sflag [#allocation5], 1
    %412 = vsyncpa %s411, 1

</llo_original>
